<compile_context>
chip_gen: v7x
topology: tpu7x:2x2x1
jax: 0.10.0
libtpu: 0.0.40
codegen_flags: <defaults>
</compile_context>

<pallas_src>
import numpy as np
import jax
import jax.numpy as jnp
from jax.experimental import pallas as pl
from jax.experimental.pallas import tpu as pltpu


def phase_mask_kernel(c_ref, f_ref, o_ref):
    """out = field * exp(i*phase), expanded into real/imag arithmetic.

    c_ref: (2, NNp)      -- [cos(phase); sin(phase)], flattened & padded
    f_ref: (2, Bt, NNp)  -- [Re(field); Im(field)] for Bt batch elements
    o_ref: (2, Bt, NNp)  -- [Re(out);   Im(out)]
    """
    c = c_ref[...]            # (2, NNp)
    cos_p = c[0:1]            # (1, NNp): broadcast over the batch sublanes
    sin_p = c[1:2]
    fr = f_ref[0]             # (Bt, NNp)
    fi = f_ref[1]
    o_ref[0] = fr * cos_p - fi * sin_p
    o_ref[1] = fr * sin_p + fi * cos_p


def _round_up(x, m):
    return ((x + m - 1) // m) * m


def phase_mask(field_r, field_i, phase, *, batch_tile=8):
    """Apply PhaseMask to a batch of complex fields given as real/imag parts."""
    B, N, _ = field_r.shape
    NN = N * N
    NNp = _round_up(NN, 128)          # lane-dense last dim (multiple of 128)
    bt = _round_up(batch_tile, 8)     # sublane-aligned batch tile
    B_pad = _round_up(max(B, bt), bt)
    grid = B_pad // bt                # >= 2 for demo sizes -> both v7x TCs busy

    # Pack constants into one (2, NNp) block: [cos(phase); sin(phase)].
    cz = jnp.stack([jnp.cos(phase).reshape(NN), jnp.sin(phase).reshape(NN)])
    cz = jnp.pad(cz, ((0, 0), (0, NNp - NN))).astype(jnp.float32)

    # Pack the field into one (2, B_pad, NNp) stack: [real; imag].
    fr = jnp.pad(field_r.reshape(B, NN), ((0, B_pad - B), (0, NNp - NN)))
    fi = jnp.pad(field_i.reshape(B, NN), ((0, B_pad - B), (0, NNp - NN)))
    fz = jnp.stack([fr, fi]).astype(jnp.float32)

    out = pl.pallas_call(
        phase_mask_kernel,
        out_shape=jax.ShapeDtypeStruct((2, B_pad, NNp), jnp.float32),
        grid_spec=pltpu.PrefetchScalarGridSpec(
            num_scalar_prefetch=0,
            grid=(grid,),
            in_specs=[
                pl.BlockSpec((2, NNp), lambda b: (0, 0)),          # cos/sin
                pl.BlockSpec((2, bt, NNp), lambda b: (0, b, 0)),   # field tile
            ],
            out_specs=pl.BlockSpec((2, bt, NNp), lambda b: (0, b, 0)),
        ),
        compiler_params=pltpu.CompilerParams(
            dimension_semantics=("parallel",),
            vmem_limit_bytes=64 * 1024 * 1024,
        ),
    )(cz, fz)

    out_r = out[0, :B, :NN].reshape(B, N, N)
    out_i = out[1, :B, :NN].reshape(B, N, N)
    return out_r, out_i


if __name__ == "__main__":
    B = 16       # batch of complex input fields (grid of 2 tiles of 8)
    N = 16       # PhaseMask size (phase parameter is N x N)

    key = jax.random.PRNGKey(0)
    k_phase, k_fr, k_fi = jax.random.split(key, 3)

    # PhaseMask parameter: uniform(0, 2*pi), shape (N, N)
    phase = jax.random.uniform(k_phase, (N, N), jnp.float32,
                               minval=0.0, maxval=2.0 * np.pi)

    # Input complex field, shape (B, N, N), split into real/imag parts.
    field_r = jax.random.normal(k_fr, (B, N, N), jnp.float32)
    field_i = jax.random.normal(k_fi, (B, N, N), jnp.float32)

    out_r, out_i = phase_mask(field_r, field_i, phase)
    jax.block_until_ready((out_r, out_i))

    # Pure-JAX reference (same semantics as the PyTorch module's forward).
    field = field_r + 1j * field_i
    ref = field * jnp.exp(1j * phase)
    got = out_r + 1j * out_i
    np.testing.assert_allclose(np.asarray(got), np.asarray(ref),
                               rtol=1e-4, atol=1e-5)

    print("KERNEL_OK")
</pallas_src>

<mosaic_0001>
module attributes {stable_mosaic.version = 11 : i64} {
  func.func @phase_mask_kernel(%arg0: i32, %arg1: memref<2x256xf32, #tpu.memory_space<vmem>>, %arg2: memref<2x8x256xf32, #tpu.memory_space<vmem>>, %arg3: memref<2x8x256xf32, #tpu.memory_space<vmem>>) attributes {dimension_semantics = [#tpu.dimension_semantics<parallel>], iteration_bounds = array<i64: 2>, scalar_prefetch = 0 : i64, scratch_operands = 0 : i64, tpu.core_type = #tpu.core_type<tc>, window_params = [{pipeline_mode = #tpu.pipeline_mode<synchronous>, transform_indices = @transform_0, window_bounds = array<i64: 2, 256>}, {transform_indices = @transform_1, window_bounds = array<i64: 2, 8, 256>}, {transform_indices = @transform_2, window_bounds = array<i64: 2, 8, 256>}]} {
    %c0 = arith.constant 0 : index
    %c0_0 = arith.constant 0 : index
    %0 = vector.load %arg1[%c0, %c0_0] : memref<2x256xf32, #tpu.memory_space<vmem>>, vector<2x256xf32>
    %1 = vector.extract_strided_slice %0 {offsets = [0, 0], sizes = [1, 256], strides = [1, 1]} : vector<2x256xf32> to vector<1x256xf32>
    %2 = vector.extract_strided_slice %0 {offsets = [1, 0], sizes = [1, 256], strides = [1, 1]} : vector<2x256xf32> to vector<1x256xf32>
    %c0_1 = arith.constant 0 : index
    %c0_2 = arith.constant 0 : index
    %c0_3 = arith.constant 0 : index
    %3 = vector.load %arg2[%c0_1, %c0_2, %c0_3] : memref<2x8x256xf32, #tpu.memory_space<vmem>>, vector<1x8x256xf32>
    %4 = vector.shape_cast %3 : vector<1x8x256xf32> to vector<8x256xf32>
    %c1 = arith.constant 1 : index
    %c0_4 = arith.constant 0 : index
    %c0_5 = arith.constant 0 : index
    %5 = vector.load %arg2[%c1, %c0_4, %c0_5] : memref<2x8x256xf32, #tpu.memory_space<vmem>>, vector<1x8x256xf32>
    %6 = vector.shape_cast %5 : vector<1x8x256xf32> to vector<8x256xf32>
    %7 = vector.broadcast %1 : vector<1x256xf32> to vector<8x256xf32>
    %8 = arith.mulf %4, %7 : vector<8x256xf32>
    %9 = vector.broadcast %2 : vector<1x256xf32> to vector<8x256xf32>
    %10 = arith.mulf %6, %9 : vector<8x256xf32>
    %11 = arith.subf %8, %10 : vector<8x256xf32>
    %c0_6 = arith.constant 0 : index
    %c0_7 = arith.constant 0 : index
    %c0_8 = arith.constant 0 : index
    %12 = vector.load %arg3[%c0_6, %c0_7, %c0_8] : memref<2x8x256xf32, #tpu.memory_space<vmem>>, vector<1x8x256xf32>
    %13 = vector.shape_cast %12 : vector<1x8x256xf32> to vector<8x256xf32>
    %14 = vector.shape_cast %11 : vector<8x256xf32> to vector<1x8x256xf32>
    tpu.vector_store %arg3[%c0_6, %c0_7, %c0_8], %14 {strides = array<i32>} : memref<2x8x256xf32, #tpu.memory_space<vmem>>, vector<1x8x256xf32>,
    %15 = vector.broadcast %2 : vector<1x256xf32> to vector<8x256xf32>
    %16 = arith.mulf %4, %15 : vector<8x256xf32>
    %17 = vector.broadcast %1 : vector<1x256xf32> to vector<8x256xf32>
    %18 = arith.mulf %6, %17 : vector<8x256xf32>
    %19 = arith.addf %16, %18 : vector<8x256xf32>
    %c1_9 = arith.constant 1 : index
    %c0_10 = arith.constant 0 : index
    %c0_11 = arith.constant 0 : index
    %20 = vector.load %arg3[%c1_9, %c0_10, %c0_11] : memref<2x8x256xf32, #tpu.memory_space<vmem>>, vector<1x8x256xf32>
    %21 = vector.shape_cast %20 : vector<1x8x256xf32> to vector<8x256xf32>
    %22 = vector.shape_cast %19 : vector<8x256xf32> to vector<1x8x256xf32>
    tpu.vector_store %arg3[%c1_9, %c0_10, %c0_11], %22 {strides = array<i32>} : memref<2x8x256xf32, #tpu.memory_space<vmem>>, vector<1x8x256xf32>,
    return
  }
  func.func @transform_0(%arg0: i32) -> (i32, i32) {
    %c0_i32 = arith.constant 0 : i32
    %c0_i32_0 = arith.constant 0 : i32
    %c0_i32_1 = arith.constant 0 : i32
    return %c0_i32, %c0_i32_0 : i32, i32
  }
  func.func @transform_1(%arg0: i32) -> (i32, i32, i32) {
    %c0_i32 = arith.constant 0 : i32
    %c0_i32_0 = arith.constant 0 : i32
    %c0_i32_1 = arith.constant 0 : i32
    return %c0_i32, %arg0, %c0_i32_0 : i32, i32, i32
  }
  func.func @transform_2(%arg0: i32) -> (i32, i32, i32) {
    %c0_i32 = arith.constant 0 : i32
    %c0_i32_0 = arith.constant 0 : i32
    %c0_i32_1 = arith.constant 0 : i32
    return %c0_i32, %arg0, %c0_i32_0 : i32, i32, i32
  }
}

</mosaic_0001>

<llo_original>
// kernel: tpu_custom_call.1
$region0: #{tpu_custom_call.1}
  #allocation0 [shape = 'u32[]', space=smem, size = 0x4, offset = 0x4, fixed_abs, tag = 'smem constant byte address 0x4 - core index']
  #allocation1 [shape = 'u32[144,128]{1,0:T(1,128)}', space=vmem, size = 0x12000, scoped, tag = 'internal scratch']
  %s0 = inlined_call_operand.hbm [shape: f32[2,256], index: 0, kind: input, shape index: {}]
  %s1 = inlined_call_operand.hbm [shape: f32[2,16,256], index: 1, kind: input, shape index: {}]
  %s2 = inlined_call_operand.hbm [shape: f32[2,16,256], index: 2, kind: output, shape index: {}]
  %s3 = sld [smem:[#allocation0]]
  $region49: #{tpu_custom_call.1} parent=0
    _
  %s5 = ssub.s32 1, %s3
  %s6 = scalar_select 0, %s5, %s3
  $region1: #{tpu_custom_call.1} parent=0
    #allocation2 [shape = 'u8[2048]{0}', space=vmem, size = 0x800, scoped, tag = 'input window, operand 0, single buffered']
    #allocation3 [shape = 's32[2]{0}', space=sflag, size = 0x8, scoped, tag = 'scoped memory for tpu_custom_call.1']
    #allocation4 [shape = 's32[2]{0}', space=sflag, size = 0x8, scoped, tag = 'scoped memory for tpu_custom_call.1']
    #allocation5 [shape = 'u8[32768]{0}', space=vmem, size = 0x8000, scoped, tag = 'input window, operand 1']
    #allocation6 [shape = 's32[2]{0}', space=sflag, size = 0x8, scoped, tag = 'scoped memory for tpu_custom_call.1']
    #allocation7 [shape = 'u8[32768]{0}', space=vmem, size = 0x8000, scoped, tag = 'output window, operand 0']
    %7 = vsyncpa [#allocation3], 0
    %8 = vsyncpa [#allocation6], 0
    %s9 = scalar_lea.sflag [#allocation6], 1
    %10 = vsyncpa %s9, 0
    %11 = vsyncpa [#allocation4], 0
    %s12 = scalar_lea.sflag [#allocation4], 1
    %13 = vsyncpa %s12, 0
    loop: start=0, step=1, limit=4
    $region2: #{tpu_custom_call.1} parent=1 // loop_pre_header
      _
    $region3: #{tpu_custom_call.1} parent=1 // loop_header
      %s15 = sphi 0, %s19
      %p16 = scmp.ge.s32.totalorder %s15, 4
      %s23 = sphi 0, %s23
      %s25 = sphi 0, %s23
      %s26 = sphi 0, %s25
      %s40 = sphi 0, %s26
      %s46 = sphi 0, %s48
      %s49 = sphi 0, %s46
      %s50 = sphi 0, %s49
      %s66 = sphi 0, %s50
      %s72 = sphi 0, %s74
      %s75 = sphi 0, %s72
      %s76 = sphi 0, %s75
      %s92 = sphi 0, %s76
    $region4: #{tpu_custom_call.1} parent=1 // loop_header_branch
      %18 = sbr.rel (%p16) target = $region8
    $region5: #{tpu_custom_call.1} parent=1 // loop_body
      %s20 = ssub.s32 %s15, 1
      %s21 = ssub.s32 %s15, 2
      %s22 = sadd.s32 %s15, 1
      %s24 = sadd.s32 %s23, 1
      %p27 = scmp.eq.s32.totalorder %s15, 1
      %p28 = scmp.ne.s32.totalorder %s23, %s25
      %p29 = scmp.eq.s32.totalorder %s15, 0
      %p30 = por %p28, %p29
      %p31 = scmp.ne.s32.totalorder %s23, %s25
      %p32 = scmp.eq.s32.totalorder %s20, 1
      %p33 = por %p31, %p32
      %p34 = scmp.ne.s32.totalorder %s25, %s26
      %p35 = scmp.eq.s32.totalorder %s20, 0
      %p36 = por %p34, %p35
      %p37 = scmp.ne.s32.totalorder %s25, %s26
      %p38 = scmp.eq.s32.totalorder %s21, 1
      %p39 = por %p37, %p38
      %p41 = scmp.ne.s32.totalorder %s26, %s40
      %p42 = scmp.eq.s32.totalorder %s21, 0
      %p43 = por %p41, %p42
      %s44 = ssub.s32 %s15, %s22
      %p45 = scmp.eq.s32.totalorder %s44, 0
      %s47 = sadd.s32 %s46, 1
      %s48 = scalar_select %p45, %s46, %s47
      %p51 = pneg %p45
      %p52 = scmp.eq.s32.totalorder %s15, 1
      %p53 = por %p51, %p52
      %p54 = scmp.ne.s32.totalorder %s46, %s49
      %p55 = scmp.eq.s32.totalorder %s15, 0
      %p56 = por %p54, %p55
      %p57 = scmp.ne.s32.totalorder %s46, %s49
      %p58 = scmp.eq.s32.totalorder %s20, 1
      %p59 = por %p57, %p58
      %p60 = scmp.ne.s32.totalorder %s49, %s50
      %p61 = scmp.eq.s32.totalorder %s20, 0
      %p62 = por %p60, %p61
      %p63 = scmp.ne.s32.totalorder %s49, %s50
      %p64 = scmp.eq.s32.totalorder %s21, 1
      %p65 = por %p63, %p64
      %p67 = scmp.ne.s32.totalorder %s50, %s66
      %p68 = scmp.eq.s32.totalorder %s21, 0
      %p69 = por %p67, %p68
      %s70 = ssub.s32 %s15, %s22
      %p71 = scmp.eq.s32.totalorder %s70, 0
      %s73 = sadd.s32 %s72, 1
      %s74 = scalar_select %p71, %s72, %s73
      %p77 = pneg %p71
      %p78 = scmp.eq.s32.totalorder %s15, 1
      %p79 = por %p77, %p78
      %p80 = scmp.ne.s32.totalorder %s72, %s75
      %p81 = scmp.eq.s32.totalorder %s15, 0
      %p82 = por %p80, %p81
      %p83 = scmp.ne.s32.totalorder %s72, %s75
      %p84 = scmp.eq.s32.totalorder %s20, 1
      %p85 = por %p83, %p84
      %p86 = scmp.ne.s32.totalorder %s75, %s76
      %p87 = scmp.eq.s32.totalorder %s20, 0
      %p88 = por %p86, %p87
      %p89 = scmp.ne.s32.totalorder %s75, %s76
      %p90 = scmp.eq.s32.totalorder %s21, 1
      %p91 = por %p89, %p90
      %p93 = scmp.ne.s32.totalorder %s76, %s92
      %p94 = scmp.eq.s32.totalorder %s21, 0
      %p95 = por %p93, %p94
      %p96 = scmp.le.s32.totalorder 1, %s15
      %p97 = scmp.lt.s32.totalorder %s15, 3
      %p98 = pnand %p96, %p97
      %p99 = pneg %p98
      // Predicated region
      $region9: #{tpu_custom_call.1} parent=5 // pred_check
        _
      $region10: #{tpu_custom_call.1} parent=5 // pred_check_branch
        %101 = sbr.rel (%p98) target = $region12
      $region11: #{tpu_custom_call.1} parent=5 // pred_region
        %s102 = ssub.s32 %s15, 1
        // Predicated region
        $region13: #{tpu_custom_call.1} parent=11 // pred_check
          %p103 = pneg %p36
        $region14: #{tpu_custom_call.1} parent=11 // pred_check_branch
          %105 = sbr.rel (%p103) target = $region16
        $region15: #{tpu_custom_call.1} parent=11 // pred_region
          %s107 = ssub.s32 64, 64
          %108 = vsyncadd [#allocation3], %s107
          %s110 = sshll.u32 [#allocation2], 4
          %s111 = int_to_ptr.vmem [resolvable:$true] %s110
          %113 = dma.hbm_to_vmem [thread:$0]  %s0, 64, %s111, [#allocation3]
        $region16: #{tpu_custom_call.1} parent=11 // pred_fallthru
          _
      $region12: #{tpu_custom_call.1} parent=5 // pred_fallthru
        _
      %p114 = scmp.lt.s32.totalorder %s15, 2
      // Predicated region
      $region17: #{tpu_custom_call.1} parent=5 // pred_check
        %p115 = pneg %p114
      $region18: #{tpu_custom_call.1} parent=5 // pred_check_branch
        %117 = sbr.rel (%p115) target = $region20
      $region19: #{tpu_custom_call.1} parent=5 // pred_region
        // Predicated region
        $region21: #{tpu_custom_call.1} parent=19 // pred_check
          %p118 = pneg %p56
        $region22: #{tpu_custom_call.1} parent=19 // pred_check_branch
          %120 = sbr.rel (%p118) target = $region24
        $region23: #{tpu_custom_call.1} parent=19 // pred_region
          %s121 = sand.u32 %s46, 1
          %s122 = scalar_lea.sflag [#allocation6], %s121
          %s123 = sand.u32 %s46, 1
          %s124 = smul.addr %s123, 32
          %s125 = scalar_lea.vmem [#allocation5], %s124
          %s127 = ssub.s32 512, 512
          %128 = vsyncadd %s122, %s127
          %s129 = smul.addr %s15, 2
          %s130 = smul.addr %s129, 128
          %s131 = scalar_lea.hbm %s1, %s130
          %s132 = sshll.u32 %s125, 4
          %s133 = int_to_ptr.vmem [resolvable:$true] %s132
          %138 = dma.hbm_to_vmem [thread:$0]  %s131, 512, %s133, %s122, 512, 256, 16
        $region24: #{tpu_custom_call.1} parent=19 // pred_fallthru
          _
      $region20: #{tpu_custom_call.1} parent=5 // pred_fallthru
        _
      %p139 = scmp.le.s32.totalorder 1, %s15
      %p140 = scmp.lt.s32.totalorder %s15, 3
      %p141 = pnand %p139, %p140
      %p142 = pneg %p141
      // Predicated region
      $region25: #{tpu_custom_call.1} parent=5 // pred_check
        _
      $region26: #{tpu_custom_call.1} parent=5 // pred_check_branch
        %144 = sbr.rel (%p141) target = $region28
      $region27: #{tpu_custom_call.1} parent=5 // pred_region
        %s145 = ssub.s32 %s15, 1
        // Predicated region
        $region29: #{tpu_custom_call.1} parent=27 // pred_check
          %p146 = pneg %p36
        $region30: #{tpu_custom_call.1} parent=27 // pred_check_branch
          %148 = sbr.rel (%p146) target = $region32
        $region31: #{tpu_custom_call.1} parent=27 // pred_region
          %149 = dma.done [#allocation3], 64
        $region32: #{tpu_custom_call.1} parent=27 // pred_fallthru
          _
        %s150 = sand.u32 %s49, 1
        %s151 = scalar_lea.sflag [#allocation6], %s150
        %s152 = sand.u32 %s49, 1
        %s153 = smul.addr %s152, 32
        %s154 = scalar_lea.vmem [#allocation5], %s153
        // Predicated region
        $region33: #{tpu_custom_call.1} parent=27 // pred_check
          %p155 = pneg %p62
        $region34: #{tpu_custom_call.1} parent=27 // pred_check_branch
          %157 = sbr.rel (%p155) target = $region36
        $region35: #{tpu_custom_call.1} parent=27 // pred_region
          %158 = dma.done %s151, 512
        $region36: #{tpu_custom_call.1} parent=27 // pred_fallthru
          _
        %p159 = pneg %p36
        %p160 = pneg %p33
        %s161 = sand.u32 %s49, 1
        %s162 = scalar_lea.sflag [#allocation6], %s161
        %s163 = sand.u32 %s49, 1
        %s164 = smul.addr %s163, 32
        %s165 = scalar_lea.vmem [#allocation5], %s164
        %p166 = pneg %p62
        %p167 = pneg %p59
        %p168 = pneg %p88
        %p169 = pneg %p85
        %s170 = sand.u32 %s75, 1
        %s171 = scalar_lea.sflag [#allocation4], %s170
        %s172 = sand.u32 %s75, 1
        %s173 = smul.addr %s172, 32
        %s174 = scalar_lea.vmem [#allocation7], %s173
        %v175 = vld [vmem:[#allocation2] sm:$0xf]
        %v176 = vld [vmem:[%s154] sm:$0xff]
        %v177 = vld [vmem:[%s154 + $0x8] sm:$0xff]
        %s178 = scalar_lea.vmem %s154, 16 [#allocation5]
        %v179 = vld [vmem:[%s178] sm:$0xff]
        %v180 = vld [vmem:[%s178 + $0x8] sm:$0xff]
        %v182 = vlaneseq
        %v183 = vshrl.u32 %v182, 7
        %v184 = vsub.s32 0, %v183
        %v185 = vrot.slane %v175, %v184
        %v186 = vlaneseq
        %v187 = vshrl.u32 %v186, 7
        %v188 = vsub.s32 2, %v187
        %v189 = vrot.slane %v175, %v188
        %v192 = vlaneseq
        %v193 = vshrl.u32 %v192, 7
        %v194 = vsub.s32 0, %v193
        %v195 = vrot.slane %v185, %v194
        %v196 = vlaneseq
        %v197 = vshrl.u32 %v196, 7
        %v198 = vsub.s32 0, %v197
        %v199 = vrot.slane %v189, %v198
        %v200 = vmul.f32 %v176, %v195
        %v201 = vmul.f32 %v177, %v199
        %v202 = vlaneseq
        %v203 = vshrl.u32 %v202, 7
        %v204 = vsub.s32 1, %v203
        %v205 = vrot.slane %v175, %v204
        %v206 = vlaneseq
        %v207 = vshrl.u32 %v206, 7
        %v208 = vsub.s32 3, %v207
        %v209 = vrot.slane %v175, %v208
        %v212 = vlaneseq
        %v213 = vshrl.u32 %v212, 7
        %v214 = vsub.s32 1, %v213
        %v215 = vrot.slane %v205, %v214
        %v216 = vlaneseq
        %v217 = vshrl.u32 %v216, 7
        %v218 = vsub.s32 1, %v217
        %v219 = vrot.slane %v209, %v218
        %v220 = vmul.f32 %v179, %v215
        %v221 = vmul.f32 %v180, %v219
        %v222 = vsub.f32 %v200, %v220
        %v223 = vsub.f32 %v201, %v221
        %224 = vst [vmem:[%s174] sm:$0xff] %v222
        %225 = vst [vmem:[%s174 + $0x8] sm:$0xff] %v223
        %v226 = vmul.f32 %v176, %v215
        %v227 = vmul.f32 %v177, %v219
        %v228 = vmul.f32 %v179, %v195
        %v229 = vmul.f32 %v180, %v199
        %v230 = vadd.f32 %v226, %v228
        %v231 = vadd.f32 %v227, %v229
        %s232 = scalar_lea.vmem %s174, 16 [#allocation7]
        %233 = vst [vmem:[%s232] sm:$0xff] %v230
        %234 = vst [vmem:[%s232 + $0x8] sm:$0xff] %v231
        %s235 = sand.u32 %s75, 1
        %s236 = scalar_lea.sflag [#allocation4], %s235
        %s237 = sand.u32 %s75, 1
        %s238 = smul.addr %s237, 32
        %s239 = scalar_lea.vmem [#allocation7], %s238
        // Predicated region
        $region37: #{tpu_custom_call.1} parent=27 // pred_check
          %p240 = pneg %p85
        $region38: #{tpu_custom_call.1} parent=27 // pred_check_branch
          %242 = sbr.rel (%p240) target = $region40
        $region39: #{tpu_custom_call.1} parent=27 // pred_region
          %s244 = ssub.s32 512, 512
          %245 = vsyncadd %s236, %s244
          %s246 = smul.addr %s20, 2
          %s247 = smul.addr %s246, 128
          %s248 = scalar_lea.hbm %s2, %s247
          %s249 = sshll.u32 %s239, 4
          %s250 = int_to_ptr.vmem [resolvable:$true] %s249
          %255 = dma.vmem_to_hbm [thread:$0]  %s250, 512, %s248, %s236, 256, 512, 16
        $region40: #{tpu_custom_call.1} parent=27 // pred_fallthru
          _
      $region28: #{tpu_custom_call.1} parent=5 // pred_fallthru
        _
      %p256 = scmp.le.s32.totalorder 2, %s15
      // Predicated region
      $region41: #{tpu_custom_call.1} parent=5 // pred_check
        %p257 = pneg %p256
      $region42: #{tpu_custom_call.1} parent=5 // pred_check_branch
        %259 = sbr.rel (%p257) target = $region44
      $region43: #{tpu_custom_call.1} parent=5 // pred_region
        %s260 = ssub.s32 %s15, 2
        // Predicated region
        $region45: #{tpu_custom_call.1} parent=43 // pred_check
          %p261 = pneg %p91
        $region46: #{tpu_custom_call.1} parent=43 // pred_check_branch
          %263 = sbr.rel (%p261) target = $region48
        $region47: #{tpu_custom_call.1} parent=43 // pred_region
          %s264 = sand.u32 %s76, 1
          %s265 = scalar_lea.sflag [#allocation4], %s264
          %s266 = sand.u32 %s76, 1
          %s267 = smul.addr %s266, 32
          %s268 = scalar_lea.vmem [#allocation7], %s267
          %269 = dma.done %s265, 512
        $region48: #{tpu_custom_call.1} parent=43 // pred_fallthru
          _
      $region44: #{tpu_custom_call.1} parent=5 // pred_fallthru
        _
    $region6: #{tpu_custom_call.1} parent=1 // loop_footer
      %s19 = sadd.s32 1, %s15
    $region7: #{tpu_custom_call.1} parent=1 // loop_footer_branch
      %14 = sbr.rel target = $region3
    $region8: #{tpu_custom_call.1} parent=1 // loop_exit
      _
    %270 = vsyncpa [#allocation3], 1
    %s271 = scalar_lea.sflag [#allocation3], 1
    %272 = vsyncpa %s271, 1
    %273 = vsyncpa [#allocation6], 1
    %s274 = scalar_lea.sflag [#allocation6], 1
    %275 = vsyncpa %s274, 1
    %276 = vsyncpa [#allocation4], 1
    %s277 = scalar_lea.sflag [#allocation4], 1
    %278 = vsyncpa %s277, 1

</llo_original>
